<compile_context>
chip_gen: v7x
topology: tpu7x:2x2x1
jax: 0.10.0
libtpu: 0.0.40
codegen_flags: <defaults>
</compile_context>

<pallas_src>
import jax
import jax.numpy as jnp
from jax.experimental import pallas as pl
from jax.experimental.pallas import tpu as pltpu


def _softplus(x):
    # numerically stable softplus, matches F.softplus semantics
    return jnp.maximum(x, 0.0) + jnp.log1p(jnp.exp(-jnp.abs(x)))


def _cumsum_time(y, t_iota):
    """Inclusive prefix sum over axis=1 via log2(T) shift-adds.

    The shift is a pltpu.roll (sublane rotate on the XLU slot) masked with a
    broadcasted iota, so no concatenate/slice copies go through the load/store
    slots.
    """
    _, t, _ = y.shape
    s = 1
    while s < t:
        shifted = jnp.where(t_iota >= s, pltpu.roll(y, shift=s, axis=1), 0.0)
        y = y + shifted
        s *= 2
    return y


def mingru_kernel(x_ref, whg_ref, wo_ref, out_ref, hn_ref,
                  carry_a_ref, carry_lse_ref):
    Bt, Tt, D = x_ref.shape
    Hp = whg_ref.shape[1] // 2
    Op = wo_ref.shape[1]

    # (Re)initialize the cross-tile scan carry at the first time tile of each
    # batch tile.  Training mode: h_0 = 0  =>  log h_0 = -inf.
    @pl.when(pl.program_id(1) == 0)
    def _():
        carry_a_ref[...] = jnp.zeros_like(carry_a_ref)
        carry_lse_ref[...] = jnp.full_like(carry_lse_ref, -jnp.inf)

    # ---- single fused input projection on the MXU; split is lane-aligned
    # because Hp is a multiple of 128 ----
    xf = x_ref[...].reshape(Bt * Tt, D)
    hg = jnp.dot(xf, whg_ref[...],
                 preferred_element_type=jnp.float32).reshape(Bt, Tt, 2 * Hp)
    hidden = hg[..., :Hp]
    gate = hg[..., Hp:]

    # ---- elementwise log-space quantities (VPU / EUP) ----
    log_coeffs = -_softplus(gate)                       # log a_t
    # softplus identity: -softplus(-x) = x - softplus(x)
    log_z = gate + log_coeffs                           # log z_t
    # log g(h) with a single log (both where-branches are log-safe)
    log_tilde_h = jnp.log(jnp.where(hidden >= 0.0,
                                    hidden + 0.5,
                                    jax.nn.sigmoid(hidden)))
    log_values = log_z + log_tilde_h

    # ---- Heinsen scan, fully vectorized over the time tile ----
    #   a[t] = carry_a + cumsum_t(log_coeffs)
    #   m    = max(carry_lse, max_t(log_values - a))
    #   cs   = cumsum_t(exp(log_values - a - m)) + exp(carry_lse - m)
    #   h[t] = exp(a[t] + m) * cs[t]
    t_iota = jax.lax.broadcasted_iota(jnp.int32, (Bt, Tt, Hp), 1)
    carry_a = carry_a_ref[...]                          # (Bt, 1, Hp)
    carry_lse = carry_lse_ref[...]                      # (Bt, 1, Hp)

    a = carry_a + _cumsum_time(log_coeffs, t_iota)      # (Bt, Tt, Hp)
    v = log_values - a
    m = jnp.maximum(carry_lse, jnp.max(v, axis=1, keepdims=True))  # (Bt, 1, Hp)
    e = jnp.exp(v - m)
    e0 = jnp.exp(carry_lse - m)                         # exp(-inf) = 0 on first tile
    cs = _cumsum_time(e, t_iota) + e0                   # (Bt, Tt, Hp)
    h = jnp.exp(a + m) * cs                             # log-free reconstruction

    # carries for the next time tile (the only remaining log is (Bt,1,Hp))
    carry_a_ref[...] = a[:, Tt - 1:Tt, :]
    carry_lse_ref[...] = m + jnp.log(cs[:, Tt - 1:Tt, :])

    # ---- outputs ----
    @pl.when(pl.program_id(1) == pl.num_programs(1) - 1)
    def _():
        hn_ref[...] = h[:, Tt - 1:Tt, :]

    out_ref[...] = jnp.dot(h.reshape(Bt * Tt, Hp).astype(wo_ref.dtype),
                           wo_ref[...],
                           preferred_element_type=jnp.float32
                           ).reshape(Bt, Tt, Op)


def _round_up(n, m):
    return ((n + m - 1) // m) * m


def _vmem_footprint_bytes(bb, bt, D, Hp, Op):
    """Rough per-tile VMEM estimate: double-buffered I/O + weights + live temps."""
    x_tile = 2 * bb * bt * D
    out_tile = 2 * bb * bt * Op
    hn_tile = 2 * bb * Hp
    weights = 2 * (D * 2 * Hp + Hp * Op)
    temps = 8 * bb * bt * Hp            # ~8 live (Bt,Tt,Hp) f32 temporaries
    carries = 2 * bb * Hp
    return 4 * (x_tile + out_tile + hn_tile + weights + temps + carries)


def mingru_forward(x, w_hg, w_out, *, block_b=None, block_t=None,
                   matmul_dtype=None, vmem_budget_bytes=40 * 1024 * 1024):
    """Training-mode MinGRU forward (h_0 = 0, seq_len > 1).

    x:     (B, T, D) float32
    w_hg:  (2H, D)   torch `to_hidden_and_gate.weight`
    w_out: (O, H)    torch `to_out.weight`
    matmul_dtype: optionally jnp.bfloat16 to run the MXU projections in bf16
                  (recommended on v5e); scan math stays f32.
    Returns (out (B, T, O), h_n (B, 1, H)).
    """
    B, T, D = x.shape
    H = w_hg.shape[0] // 2
    O = w_out.shape[0]
    assert T > 1, "kernel implements the seq_len > 1 (training) branch"

    # ---- lane-dense weight layout: fused hidden|gate, H and O padded to 128 ----
    Hp = _round_up(H, 128)
    Op = _round_up(O, 128)
    w_h = jnp.pad(w_hg[:H, :].T, ((0, 0), (0, Hp - H)))      # (D, Hp)
    w_g = jnp.pad(w_hg[H:, :].T, ((0, 0), (0, Hp - H)))      # (D, Hp)
    w_hgp = jnp.concatenate([w_h, w_g], axis=1)              # (D, 2*Hp)
    w_o = jnp.pad(w_out.T, ((0, Hp - H), (0, Op - O)))       # (Hp, Op)

    if matmul_dtype is not None:
        x = x.astype(matmul_dtype)
        w_hgp = w_hgp.astype(matmul_dtype)
        w_o = w_o.astype(matmul_dtype)

    # ---- tile selection ----
    if block_b is None:
        # prefer >= 2 batch grid steps so both v7x TensorCores get work
        block_b = next((c for c in (8, 4, 2, 1) if B % c == 0 and B // c >= 2),
                       next(c for c in (8, 4, 2, 1) if B % c == 0))
    if block_t is None:
        # cap at 128: prefix-sum work scales with log2(block_t); grow batch instead
        block_t = next((c for c in (128, 64, 32, 16, 8) if T % c == 0), T)
    assert B % block_b == 0 and T % block_t == 0
    assert block_t % 8 == 0 or block_t == T

    # shrink tiles until the estimated footprint fits the budget (v7x: 64 MiB phys)
    while (_vmem_footprint_bytes(block_b, block_t, D, Hp, Op) > vmem_budget_bytes
           and (block_t > 8 or block_b > 1)):
        if block_t > 8 and block_t % 2 == 0:
            block_t //= 2
        elif block_b > 1 and block_b % 2 == 0:
            block_b //= 2
        else:
            break

    nb, nt = B // block_b, T // block_t

    out_p, hn_p = pl.pallas_call(
        mingru_kernel,
        out_shape=(jax.ShapeDtypeStruct((B, T, Op), jnp.float32),
                   jax.ShapeDtypeStruct((B, 1, Hp), jnp.float32)),
        grid_spec=pltpu.PrefetchScalarGridSpec(
            num_scalar_prefetch=0,
            grid=(nb, nt),
            in_specs=[pl.BlockSpec((block_b, block_t, D), lambda b, t: (b, t, 0)),
                      # grid-invariant weights: fetched once, kept resident
                      pl.BlockSpec((D, 2 * Hp), lambda b, t: (0, 0)),
                      pl.BlockSpec((Hp, Op), lambda b, t: (0, 0))],
            out_specs=(pl.BlockSpec((block_b, block_t, Op), lambda b, t: (b, t, 0)),
                       pl.BlockSpec((block_b, 1, Hp), lambda b, t: (b, 0, 0))),
            scratch_shapes=[pltpu.VMEM((block_b, 1, Hp), jnp.float32),   # carry a
                            pltpu.VMEM((block_b, 1, Hp), jnp.float32)],  # carry lse
        ),
        compiler_params=pltpu.CompilerParams(
            dimension_semantics=("parallel", "arbitrary"),
            vmem_limit_bytes=48 * 1024 * 1024),
    )(x, w_hgp, w_o)

    return out_p[:, :, :O], hn_p[:, :, :H]


def mingru_reference(x, w_hg, w_out):
    """Plain-JAX reference with the PyTorch math (sequential logaddexp scan)."""
    B, T, D = x.shape
    H = w_hg.shape[0] // 2
    hg = x @ w_hg.T
    hidden, gate = hg[..., :H], hg[..., H:]
    log_coeffs = -jax.nn.softplus(gate)
    log_z = -jax.nn.softplus(-gate)
    log_tilde_h = jnp.where(hidden >= 0.0,
                            jnp.log(jnp.maximum(hidden, 0.0) + 0.5),
                            -jax.nn.softplus(-hidden))
    log_values = log_z + log_tilde_h
    a = jnp.zeros((B, H), jnp.float32)
    lse = jnp.full((B, H), -jnp.inf, jnp.float32)
    hs = []
    for t in range(T):
        a = a + log_coeffs[:, t, :]
        lse = jnp.logaddexp(lse, log_values[:, t, :] - a)
        hs.append(jnp.exp(a + lse))
    h = jnp.stack(hs, axis=1)
    return h @ w_out.T, h[:, T - 1:T, :]


if __name__ == "__main__":
    # Small shapes consistent with the module: batch=2, seq=16, input=16, hidden=32, out=16
    B, T, D, H, O = 2, 16, 16, 32, 16

    key = jax.random.PRNGKey(0)
    kx, kw1, kw2 = jax.random.split(key, 3)

    x = jax.random.normal(kx, (B, T, D), dtype=jnp.float32)

    # torch Linear default init: U(-1/sqrt(fan_in), 1/sqrt(fan_in)), no bias
    bound1 = 1.0 / (D ** 0.5)
    w_hg = jax.random.uniform(kw1, (2 * H, D), minval=-bound1, maxval=bound1,
                              dtype=jnp.float32)          # to_hidden_and_gate.weight
    bound2 = 1.0 / (H ** 0.5)
    w_out = jax.random.uniform(kw2, (O, H), minval=-bound2, maxval=bound2,
                               dtype=jnp.float32)         # to_out.weight

    out_ref, h_n_ref = mingru_reference(x, w_hg, w_out)

    # 1) tiled run exercising both grid axes + cross-tile scan carry
    out, h_n = mingru_forward(x, w_hg, w_out, block_b=1, block_t=8)
    out, h_n = jax.block_until_ready(out), jax.block_until_ready(h_n)
    assert out.shape == (B, T, O) and h_n.shape == (B, 1, H)
    assert jnp.allclose(out, out_ref, rtol=1e-4, atol=1e-4)
    assert jnp.allclose(h_n, h_n_ref, rtol=1e-4, atol=1e-4)

    # 2) default tile selection (batch-parallel grid, single time tile)
    out2, h_n2 = mingru_forward(x, w_hg, w_out)
    out2, h_n2 = jax.block_until_ready(out2), jax.block_until_ready(h_n2)
    assert jnp.allclose(out2, out_ref, rtol=1e-4, atol=1e-4)
    assert jnp.allclose(h_n2, h_n_ref, rtol=1e-4, atol=1e-4)

    print("KERNEL_OK")
</pallas_src>

<mosaic_0001>
module attributes {stable_mosaic.version = 11 : i64} {
  func.func @mingru_kernel(%arg0: i32, %arg1: i32, %arg2: memref<1x8x16xf32, #tpu.memory_space<vmem>>, %arg3: memref<16x256xf32, #tpu.memory_space<vmem>>, %arg4: memref<128x128xf32, #tpu.memory_space<vmem>>, %arg5: memref<1x8x128xf32, #tpu.memory_space<vmem>>, %arg6: memref<1x1x128xf32, #tpu.memory_space<vmem>>, %arg7: memref<1x1x128xf32, #tpu.memory_space<vmem>>, %arg8: memref<1x1x128xf32, #tpu.memory_space<vmem>>) attributes {dimension_semantics = [#tpu.dimension_semantics<parallel>, #tpu.dimension_semantics<arbitrary>], iteration_bounds = array<i64: 2, 2>, scalar_prefetch = 0 : i64, scratch_operands = 2 : i64, tpu.core_type = #tpu.core_type<tc>, window_params = [{transform_indices = @transform_0, window_bounds = array<i64: 1, 8, 16>}, {pipeline_mode = #tpu.pipeline_mode<synchronous>, transform_indices = @transform_1, window_bounds = array<i64: 16, 256>}, {pipeline_mode = #tpu.pipeline_mode<synchronous>, transform_indices = @transform_2, window_bounds = array<i64: 128, 128>}, {transform_indices = @transform_3, window_bounds = array<i64: 1, 8, 128>}, {transform_indices = @transform_4, window_bounds = array<i64: 1, 1, 128>}]} {
    %c0_i32 = arith.constant 0 : i32
    %0 = arith.cmpi eq, %arg1, %c0_i32 : i32
    %1 = arith.extui %0 : i1 to i32
    %c0_i32_0 = arith.constant 0 : i32
    %2 = arith.cmpi ne, %1, %c0_i32_0 : i32
    scf.if %2 {
      %cst_47 = arith.constant 0.000000e+00 : f32
      %103 = vector.broadcast %cst_47 : f32 to vector<1x1x128xf32>
      %c0_48 = arith.constant 0 : index
      %c0_49 = arith.constant 0 : index
      %c0_50 = arith.constant 0 : index
      %104 = vector.load %arg7[%c0_48, %c0_49, %c0_50] : memref<1x1x128xf32, #tpu.memory_space<vmem>>, vector<1x1x128xf32>
      tpu.vector_store %arg7[%c0_48, %c0_49, %c0_50], %103 {strides = array<i32>} : memref<1x1x128xf32, #tpu.memory_space<vmem>>, vector<1x1x128xf32>,
      %cst_51 = arith.constant 0xFF800000 : f32
      %105 = vector.broadcast %cst_51 : f32 to vector<1x1x128xf32>
      %c0_52 = arith.constant 0 : index
      %c0_53 = arith.constant 0 : index
      %c0_54 = arith.constant 0 : index
      %106 = vector.load %arg8[%c0_52, %c0_53, %c0_54] : memref<1x1x128xf32, #tpu.memory_space<vmem>>, vector<1x1x128xf32>
      tpu.vector_store %arg8[%c0_52, %c0_53, %c0_54], %105 {strides = array<i32>} : memref<1x1x128xf32, #tpu.memory_space<vmem>>, vector<1x1x128xf32>,
    } else {
    }
    %c0 = arith.constant 0 : index
    %c0_1 = arith.constant 0 : index
    %c0_2 = arith.constant 0 : index
    %3 = vector.load %arg2[%c0, %c0_1, %c0_2] : memref<1x8x16xf32, #tpu.memory_space<vmem>>, vector<1x8x16xf32>
    %4 = vector.shape_cast %3 : vector<1x8x16xf32> to vector<8x16xf32>
    %c0_3 = arith.constant 0 : index
    %c0_4 = arith.constant 0 : index
    %5 = vector.load %arg3[%c0_3, %c0_4] : memref<16x256xf32, #tpu.memory_space<vmem>>, vector<16x256xf32>
    %cst = arith.constant dense<0.000000e+00> : vector<8x256xf32>
    %6 = tpu.matmul %4, %5, %cst {dimension_numbers = #tpu.dot_dimension_numbers<[1], [0], [0], [1], [0, 0, 1, 1], [], []>} : vector<8x16xf32>, vector<16x256xf32>, vector<8x256xf32> -> vector<8x256xf32>
    %7 = vector.shape_cast %6 : vector<8x256xf32> to vector<1x8x256xf32>
    %8 = vector.extract_strided_slice %7 {offsets = [0, 0, 0], sizes = [1, 8, 128], strides = [1, 1, 1]} : vector<1x8x256xf32> to vector<1x8x128xf32>
    %9 = vector.extract_strided_slice %7 {offsets = [0, 0, 128], sizes = [1, 8, 128], strides = [1, 1, 1]} : vector<1x8x256xf32> to vector<1x8x128xf32>
    %cst_5 = arith.constant 0.000000e+00 : f32
    %10 = vector.broadcast %cst_5 : f32 to vector<1x8x128xf32>
    %11 = arith.maximumf %9, %10 : vector<1x8x128xf32>
    %12 = math.absf %9 : vector<1x8x128xf32>
    %cst_6 = arith.constant 0.000000e+00 : f32
    %13 = vector.broadcast %cst_6 : f32 to vector<1x8x128xf32>
    %14 = arith.subf %13, %12 : vector<1x8x128xf32>
    %15 = math.exp %14 : vector<1x8x128xf32>
    %16 = math.log1p %15 : vector<1x8x128xf32>
    %17 = arith.addf %11, %16 : vector<1x8x128xf32>
    %cst_7 = arith.constant 0.000000e+00 : f32
    %18 = vector.broadcast %cst_7 : f32 to vector<1x8x128xf32>
    %19 = arith.subf %18, %17 : vector<1x8x128xf32>
    %20 = arith.addf %9, %19 : vector<1x8x128xf32>
    %cst_8 = arith.constant 0.000000e+00 : f32
    %21 = vector.broadcast %cst_8 : f32 to vector<1x8x128xf32>
    %22 = arith.cmpf oge, %8, %21 : vector<1x8x128xf32>
    %cst_9 = arith.constant 5.000000e-01 : f32
    %23 = vector.broadcast %cst_9 : f32 to vector<1x8x128xf32>
    %24 = arith.addf %8, %23 : vector<1x8x128xf32>
    %25 = arith.negf %8 : vector<1x8x128xf32>
    %26 = math.exp %25 : vector<1x8x128xf32>
    %cst_10 = arith.constant 1.000000e+00 : f32
    %27 = vector.broadcast %cst_10 : f32 to vector<1x8x128xf32>
    %28 = arith.addf %27, %26 : vector<1x8x128xf32>
    %29 = arith.divf %27, %28 : vector<1x8x128xf32>
    %30 = arith.select %22, %24, %29 : vector<1x8x128xi1>, vector<1x8x128xf32>
    %31 = math.log %30 : vector<1x8x128xf32>
    %32 = arith.addf %20, %31 : vector<1x8x128xf32>
    %33 = tpu.iota {dimensions = array<i32: 1>} : vector<1x8x128xi32>
    %c0_11 = arith.constant 0 : index
    %c0_12 = arith.constant 0 : index
    %c0_13 = arith.constant 0 : index
    %34 = vector.load %arg7[%c0_11, %c0_12, %c0_13] : memref<1x1x128xf32, #tpu.memory_space<vmem>>, vector<1x1x128xf32>
    %c0_14 = arith.constant 0 : index
    %c0_15 = arith.constant 0 : index
    %c0_16 = arith.constant 0 : index
    %35 = vector.load %arg8[%c0_14, %c0_15, %c0_16] : memref<1x1x128xf32, #tpu.memory_space<vmem>>, vector<1x1x128xf32>
    %c1_i32 = arith.constant 1 : i32
    %36 = vector.broadcast %c1_i32 : i32 to vector<1x8x128xi32>
    %37 = arith.cmpi sge, %33, %36 : vector<1x8x128xi32>
    %c1_i32_17 = arith.constant 1 : i32
    %38 = tpu.dynamic_rotate %19 by %c1_i32_17 dim 1 : vector<1x8x128xf32>, i32 -> vector<1x8x128xf32>
    %cst_18 = arith.constant 0.000000e+00 : f32
    %39 = vector.broadcast %cst_18 : f32 to vector<1x8x128xf32>
    %40 = arith.select %37, %38, %39 : vector<1x8x128xi1>, vector<1x8x128xf32>
    %41 = arith.addf %19, %40 : vector<1x8x128xf32>
    %c2_i32 = arith.constant 2 : i32
    %42 = vector.broadcast %c2_i32 : i32 to vector<1x8x128xi32>
    %43 = arith.cmpi sge, %33, %42 : vector<1x8x128xi32>
    %c2_i32_19 = arith.constant 2 : i32
    %44 = tpu.dynamic_rotate %41 by %c2_i32_19 dim 1 : vector<1x8x128xf32>, i32 -> vector<1x8x128xf32>
    %cst_20 = arith.constant 0.000000e+00 : f32
    %45 = vector.broadcast %cst_20 : f32 to vector<1x8x128xf32>
    %46 = arith.select %43, %44, %45 : vector<1x8x128xi1>, vector<1x8x128xf32>
    %47 = arith.addf %41, %46 : vector<1x8x128xf32>
    %c4_i32 = arith.constant 4 : i32
    %48 = vector.broadcast %c4_i32 : i32 to vector<1x8x128xi32>
    %49 = arith.cmpi sge, %33, %48 : vector<1x8x128xi32>
    %c4_i32_21 = arith.constant 4 : i32
    %50 = tpu.dynamic_rotate %47 by %c4_i32_21 dim 1 : vector<1x8x128xf32>, i32 -> vector<1x8x128xf32>
    %cst_22 = arith.constant 0.000000e+00 : f32
    %51 = vector.broadcast %cst_22 : f32 to vector<1x8x128xf32>
    %52 = arith.select %49, %50, %51 : vector<1x8x128xi1>, vector<1x8x128xf32>
    %53 = arith.addf %47, %52 : vector<1x8x128xf32>
    %54 = vector.broadcast %34 : vector<1x1x128xf32> to vector<1x8x128xf32>
    %55 = arith.addf %54, %53 : vector<1x8x128xf32>
    %56 = arith.subf %32, %55 : vector<1x8x128xf32>
    %cst_23 = arith.constant dense<0xFF800000> : vector<1x128xf32>
    %57 = vector.multi_reduction <maximumf>, %56, %cst_23 [1] : vector<1x8x128xf32> to vector<1x128xf32>
    %58 = vector.shape_cast %57 : vector<1x128xf32> to vector<1x1x128xf32>
    %59 = arith.maximumf %35, %58 : vector<1x1x128xf32>
    %60 = vector.broadcast %59 : vector<1x1x128xf32> to vector<1x8x128xf32>
    %61 = arith.subf %56, %60 : vector<1x8x128xf32>
    %62 = math.exp %61 : vector<1x8x128xf32>
    %63 = arith.subf %35, %59 : vector<1x1x128xf32>
    %64 = math.exp %63 : vector<1x1x128xf32>
    %c1_i32_24 = arith.constant 1 : i32
    %65 = vector.broadcast %c1_i32_24 : i32 to vector<1x8x128xi32>
    %66 = arith.cmpi sge, %33, %65 : vector<1x8x128xi32>
    %c1_i32_25 = arith.constant 1 : i32
    %67 = tpu.dynamic_rotate %62 by %c1_i32_25 dim 1 : vector<1x8x128xf32>, i32 -> vector<1x8x128xf32>
    %cst_26 = arith.constant 0.000000e+00 : f32
    %68 = vector.broadcast %cst_26 : f32 to vector<1x8x128xf32>
    %69 = arith.select %66, %67, %68 : vector<1x8x128xi1>, vector<1x8x128xf32>
    %70 = arith.addf %62, %69 : vector<1x8x128xf32>
    %c2_i32_27 = arith.constant 2 : i32
    %71 = vector.broadcast %c2_i32_27 : i32 to vector<1x8x128xi32>
    %72 = arith.cmpi sge, %33, %71 : vector<1x8x128xi32>
    %c2_i32_28 = arith.constant 2 : i32
    %73 = tpu.dynamic_rotate %70 by %c2_i32_28 dim 1 : vector<1x8x128xf32>, i32 -> vector<1x8x128xf32>
    %cst_29 = arith.constant 0.000000e+00 : f32
    %74 = vector.broadcast %cst_29 : f32 to vector<1x8x128xf32>
    %75 = arith.select %72, %73, %74 : vector<1x8x128xi1>, vector<1x8x128xf32>
    %76 = arith.addf %70, %75 : vector<1x8x128xf32>
    %c4_i32_30 = arith.constant 4 : i32
    %77 = vector.broadcast %c4_i32_30 : i32 to vector<1x8x128xi32>
    %78 = arith.cmpi sge, %33, %77 : vector<1x8x128xi32>
    %c4_i32_31 = arith.constant 4 : i32
    %79 = tpu.dynamic_rotate %76 by %c4_i32_31 dim 1 : vector<1x8x128xf32>, i32 -> vector<1x8x128xf32>
    %cst_32 = arith.constant 0.000000e+00 : f32
    %80 = vector.broadcast %cst_32 : f32 to vector<1x8x128xf32>
    %81 = arith.select %78, %79, %80 : vector<1x8x128xi1>, vector<1x8x128xf32>
    %82 = arith.addf %76, %81 : vector<1x8x128xf32>
    %83 = vector.broadcast %64 : vector<1x1x128xf32> to vector<1x8x128xf32>
    %84 = arith.addf %82, %83 : vector<1x8x128xf32>
    %85 = vector.broadcast %59 : vector<1x1x128xf32> to vector<1x8x128xf32>
    %86 = arith.addf %55, %85 : vector<1x8x128xf32>
    %87 = math.exp %86 : vector<1x8x128xf32>
    %88 = arith.mulf %87, %84 : vector<1x8x128xf32>
    %89 = vector.extract_strided_slice %55 {offsets = [0, 7, 0], sizes = [1, 1, 128], strides = [1, 1, 1]} : vector<1x8x128xf32> to vector<1x1x128xf32>
    %c0_33 = arith.constant 0 : index
    %c0_34 = arith.constant 0 : index
    %c0_35 = arith.constant 0 : index
    %90 = vector.load %arg7[%c0_33, %c0_34, %c0_35] : memref<1x1x128xf32, #tpu.memory_space<vmem>>, vector<1x1x128xf32>
    tpu.vector_store %arg7[%c0_33, %c0_34, %c0_35], %89 {strides = array<i32>} : memref<1x1x128xf32, #tpu.memory_space<vmem>>, vector<1x1x128xf32>,
    %91 = vector.extract_strided_slice %84 {offsets = [0, 7, 0], sizes = [1, 1, 128], strides = [1, 1, 1]} : vector<1x8x128xf32> to vector<1x1x128xf32>
    %92 = math.log %91 : vector<1x1x128xf32>
    %93 = arith.addf %59, %92 : vector<1x1x128xf32>
    %c0_36 = arith.constant 0 : index
    %c0_37 = arith.constant 0 : index
    %c0_38 = arith.constant 0 : index
    %94 = vector.load %arg8[%c0_36, %c0_37, %c0_38] : memref<1x1x128xf32, #tpu.memory_space<vmem>>, vector<1x1x128xf32>
    tpu.vector_store %arg8[%c0_36, %c0_37, %c0_38], %93 {strides = array<i32>} : memref<1x1x128xf32, #tpu.memory_space<vmem>>, vector<1x1x128xf32>,
    %c1_i32_39 = arith.constant 1 : i32
    %95 = arith.cmpi eq, %arg1, %c1_i32_39 : i32
    %96 = arith.extui %95 : i1 to i32
    %c0_i32_40 = arith.constant 0 : i32
    %97 = arith.cmpi ne, %96, %c0_i32_40 : i32
    scf.if %97 {
      %103 = vector.extract_strided_slice %88 {offsets = [0, 7, 0], sizes = [1, 1, 128], strides = [1, 1, 1]} : vector<1x8x128xf32> to vector<1x1x128xf32>
      %c0_47 = arith.constant 0 : index
      %c0_48 = arith.constant 0 : index
      %c0_49 = arith.constant 0 : index
      %104 = vector.load %arg6[%c0_47, %c0_48, %c0_49] : memref<1x1x128xf32, #tpu.memory_space<vmem>>, vector<1x1x128xf32>
      tpu.vector_store %arg6[%c0_47, %c0_48, %c0_49], %103 {strides = array<i32>} : memref<1x1x128xf32, #tpu.memory_space<vmem>>, vector<1x1x128xf32>,
    } else {
    }
    %98 = vector.shape_cast %88 : vector<1x8x128xf32> to vector<8x128xf32>
    %c0_41 = arith.constant 0 : index
    %c0_42 = arith.constant 0 : index
    %99 = vector.load %arg4[%c0_41, %c0_42] : memref<128x128xf32, #tpu.memory_space<vmem>>, vector<128x128xf32>
    %cst_43 = arith.constant dense<0.000000e+00> : vector<8x128xf32>
    %100 = tpu.matmul %98, %99, %cst_43 {dimension_numbers = #tpu.dot_dimension_numbers<[1], [0], [0], [1], [0, 0, 1, 1], [], []>} : vector<8x128xf32>, vector<128x128xf32>, vector<8x128xf32> -> vector<8x128xf32>
    %101 = vector.shape_cast %100 : vector<8x128xf32> to vector<1x8x128xf32>
    %c0_44 = arith.constant 0 : index
    %c0_45 = arith.constant 0 : index
    %c0_46 = arith.constant 0 : index
    %102 = vector.load %arg5[%c0_44, %c0_45, %c0_46] : memref<1x8x128xf32, #tpu.memory_space<vmem>>, vector<1x8x128xf32>
    tpu.vector_store %arg5[%c0_44, %c0_45, %c0_46], %101 {strides = array<i32>} : memref<1x8x128xf32, #tpu.memory_space<vmem>>, vector<1x8x128xf32>,
    return
  }
  func.func @transform_0(%arg0: i32, %arg1: i32) -> (i32, i32, i32) {
    %c0_i32 = arith.constant 0 : i32
    %c0_i32_0 = arith.constant 0 : i32
    return %arg0, %arg1, %c0_i32 : i32, i32, i32
  }
  func.func @transform_1(%arg0: i32, %arg1: i32) -> (i32, i32) {
    %c0_i32 = arith.constant 0 : i32
    %c0_i32_0 = arith.constant 0 : i32
    %c0_i32_1 = arith.constant 0 : i32
    return %c0_i32, %c0_i32_0 : i32, i32
  }
  func.func @transform_2(%arg0: i32, %arg1: i32) -> (i32, i32) {
    %c0_i32 = arith.constant 0 : i32
    %c0_i32_0 = arith.constant 0 : i32
    %c0_i32_1 = arith.constant 0 : i32
    return %c0_i32, %c0_i32_0 : i32, i32
  }
  func.func @transform_3(%arg0: i32, %arg1: i32) -> (i32, i32, i32) {
    %c0_i32 = arith.constant 0 : i32
    %c0_i32_0 = arith.constant 0 : i32
    return %arg0, %arg1, %c0_i32 : i32, i32, i32
  }
  func.func @transform_4(%arg0: i32, %arg1: i32) -> (i32, i32, i32) {
    %c0_i32 = arith.constant 0 : i32
    %c0_i32_0 = arith.constant 0 : i32
    %c0_i32_1 = arith.constant 0 : i32
    return %arg0, %c0_i32, %c0_i32_0 : i32, i32, i32
  }
}

</mosaic_0001>

<llo_original>
// kernel: tpu_custom_call.1
$region0: #{tpu_custom_call.1}
  #allocation0 [shape = 'u32[]', space=smem, size = 0x4, offset = 0x4, fixed_abs, tag = 'smem constant byte address 0x4 - core index']
  #allocation1 [shape = 'u32[144,128]{1,0:T(1,128)}', space=vmem, size = 0x12000, scoped, tag = 'internal scratch']
  #allocation2 [shape = 'f32[1,1,128]{2,1,0:T(1,128)}', space=vmem, size = 0x200, scoped, tag = 'scratch operand']
  #allocation3 [shape = 'f32[1,1,128]{2,1,0:T(1,128)}', space=vmem, size = 0x200, scoped, tag = 'scratch operand']
  %s0 = inlined_call_operand.hbm [shape: f32[2,16,16], index: 0, kind: input, shape index: {}]
  %s1 = inlined_call_operand.hbm [shape: f32[16,256], index: 1, kind: input, shape index: {}]
  %s2 = inlined_call_operand.hbm [shape: f32[128,128], index: 2, kind: input, shape index: {}]
  %s3 = inlined_call_operand.hbm [shape: f32[2,16,128], index: 3, kind: output, shape index: {0}]
  %s4 = inlined_call_operand.hbm [shape: f32[2,1,128], index: 4, kind: output, shape index: {1}]
  %5 = xla_tuple %s3, %s4
  %s6 = sld [smem:[#allocation0]]
  $region73: #{tpu_custom_call.1} parent=0
    _
  %s8 = ssub.s32 1, %s6
  %s9 = scalar_select 0, %s8, %s6
  $region1: #{tpu_custom_call.1} parent=0
    #allocation4 [shape = 'u8[8192]{0}', space=vmem, size = 0x2000, scoped, tag = 'input window, operand 0']
    #allocation5 [shape = 's32[2]{0}', space=sflag, size = 0x8, scoped, tag = 'scoped memory for tpu_custom_call.1']
    #allocation6 [shape = 's32[2]{0}', space=sflag, size = 0x8, scoped, tag = 'scoped memory for tpu_custom_call.1']
    #allocation7 [shape = 'u8[16384]{0}', space=vmem, size = 0x4000, scoped, tag = 'input window, operand 1, single buffered']
    #allocation8 [shape = 's32[1]{0}', space=sflag, size = 0x4, scoped, tag = 'scoped memory for tpu_custom_call.1']
    #allocation9 [shape = 'u8[65536]{0}', space=vmem, size = 0x10000, scoped, tag = 'input window, operand 2, single buffered']
    #allocation10 [shape = 'u8[8192]{0}', space=vmem, size = 0x2000, scoped, tag = 'output window, operand 0']
    #allocation11 [shape = 'u8[1024]{0}', space=vmem, size = 0x400, scoped, tag = 'output window, operand 1']
    #allocation12 [shape = 's32[2]{0}', space=sflag, size = 0x8, scoped, tag = 'scoped memory for tpu_custom_call.1']
    %10 = vsyncpa [#allocation5], 0
    %s11 = scalar_lea.sflag [#allocation5], 1
    %12 = vsyncpa %s11, 0
    %13 = vsyncpa [#allocation8], 0
    %14 = vsyncpa [#allocation6], 0
    %s15 = scalar_lea.sflag [#allocation6], 1
    %16 = vsyncpa %s15, 0
    %17 = vsyncpa [#allocation12], 0
    %s18 = scalar_lea.sflag [#allocation12], 1
    %19 = vsyncpa %s18, 0
    loop: start=0, step=1, limit=6
    $region2: #{tpu_custom_call.1} parent=1 // loop_pre_header
      _
    $region3: #{tpu_custom_call.1} parent=1 // loop_header
      %s21 = sphi 0, %s25
      %p22 = scmp.ge.s32.totalorder %s21, 6
      %s28 = sphi 0, %s40
      %s29 = sphi 0, %s36
      %s30 = sphi 0, %s28
      %s31 = sphi 0, %s29
      %s32 = sphi 0, %s30
      %s33 = sphi 0, %s31
      %s45 = sphi 0, %s47
      %s48 = sphi 0, %s45
      %s49 = sphi 0, %s48
      %s65 = sphi 0, %s49
      %s69 = sphi 0, %s69
      %s71 = sphi 0, %s69
      %s72 = sphi 0, %s71
      %s86 = sphi 0, %s72
      %s90 = sphi 0, %s90
      %s92 = sphi 0, %s90
      %s93 = sphi 0, %s92
      %s107 = sphi 0, %s93
      %s115 = sphi 0, %s117
      %s118 = sphi 0, %s115
      %s119 = sphi 0, %s118
      %s135 = sphi 0, %s119
      %s141 = sphi 0, %s143
      %s144 = sphi 0, %s141
      %s145 = sphi 0, %s144
      %s161 = sphi 0, %s145
    $region4: #{tpu_custom_call.1} parent=1 // loop_header_branch
      %24 = sbr.rel (%p22) target = $region8
    $region5: #{tpu_custom_call.1} parent=1 // loop_body
      %s26 = ssub.s32 %s21, 1
      %s27 = ssub.s32 %s21, 2
      %s34 = sadd.s32 1, %s29
      %p35 = scmp.ge.s32.totalorder %s34, 2
      %s36 = scalar_select %p35, 0, %s34
      %s37 = sadd.s32 1, %s28
      %s38 = scalar_select %p35, %s37, %s28
      %p39 = scmp.ge.s32.totalorder %s38, 2
      %s40 = scalar_select %p39, 0, %s38
      %s41 = ssub.s32 %s28, %s40
      %s42 = ssub.s32 %s29, %s36
      %s43 = sor.u32 %s41, %s42
      %p44 = scmp.eq.s32.totalorder %s43, 0
      %s46 = sadd.s32 %s45, 1
      %s47 = scalar_select %p44, %s45, %s46
      %p50 = pneg %p44
      %p51 = scmp.eq.s32.totalorder %s21, 3
      %p52 = por %p50, %p51
      %p53 = scmp.ne.s32.totalorder %s45, %s48
      %p54 = scmp.eq.s32.totalorder %s21, 0
      %p55 = por %p53, %p54
      %p56 = scmp.ne.s32.totalorder %s45, %s48
      %p57 = scmp.eq.s32.totalorder %s26, 3
      %p58 = por %p56, %p57
      %p59 = scmp.ne.s32.totalorder %s48, %s49
      %p60 = scmp.eq.s32.totalorder %s26, 0
      %p61 = por %p59, %p60
      %p62 = scmp.ne.s32.totalorder %s48, %s49
      %p63 = scmp.eq.s32.totalorder %s27, 3
      %p64 = por %p62, %p63
      %p66 = scmp.ne.s32.totalorder %s49, %s65
      %p67 = scmp.eq.s32.totalorder %s27, 0
      %p68 = por %p66, %p67
      %s70 = sadd.s32 %s69, 1
      %p73 = scmp.eq.s32.totalorder %s21, 3
      %p74 = scmp.ne.s32.totalorder %s69, %s71
      %p75 = scmp.eq.s32.totalorder %s21, 0
      %p76 = por %p74, %p75
      %p77 = scmp.ne.s32.totalorder %s69, %s71
      %p78 = scmp.eq.s32.totalorder %s26, 3
      %p79 = por %p77, %p78
      %p80 = scmp.ne.s32.totalorder %s71, %s72
      %p81 = scmp.eq.s32.totalorder %s26, 0
      %p82 = por %p80, %p81
      %p83 = scmp.ne.s32.totalorder %s71, %s72
      %p84 = scmp.eq.s32.totalorder %s27, 3
      %p85 = por %p83, %p84
      %p87 = scmp.ne.s32.totalorder %s72, %s86
      %p88 = scmp.eq.s32.totalorder %s27, 0
      %p89 = por %p87, %p88
      %s91 = sadd.s32 %s90, 1
      %p94 = scmp.eq.s32.totalorder %s21, 3
      %p95 = scmp.ne.s32.totalorder %s90, %s92
      %p96 = scmp.eq.s32.totalorder %s21, 0
      %p97 = por %p95, %p96
      %p98 = scmp.ne.s32.totalorder %s90, %s92
      %p99 = scmp.eq.s32.totalorder %s26, 3
      %p100 = por %p98, %p99
      %p101 = scmp.ne.s32.totalorder %s92, %s93
      %p102 = scmp.eq.s32.totalorder %s26, 0
      %p103 = por %p101, %p102
      %p104 = scmp.ne.s32.totalorder %s92, %s93
      %p105 = scmp.eq.s32.totalorder %s27, 3
      %p106 = por %p104, %p105
      %p108 = scmp.ne.s32.totalorder %s93, %s107
      %p109 = scmp.eq.s32.totalorder %s27, 0
      %p110 = por %p108, %p109
      %s111 = ssub.s32 %s28, %s40
      %s112 = ssub.s32 %s29, %s36
      %s113 = sor.u32 %s111, %s112
      %p114 = scmp.eq.s32.totalorder %s113, 0
      %s116 = sadd.s32 %s115, 1
      %s117 = scalar_select %p114, %s115, %s116
      %p120 = pneg %p114
      %p121 = scmp.eq.s32.totalorder %s21, 3
      %p122 = por %p120, %p121
      %p123 = scmp.ne.s32.totalorder %s115, %s118
      %p124 = scmp.eq.s32.totalorder %s21, 0
      %p125 = por %p123, %p124
      %p126 = scmp.ne.s32.totalorder %s115, %s118
      %p127 = scmp.eq.s32.totalorder %s26, 3
      %p128 = por %p126, %p127
      %p129 = scmp.ne.s32.totalorder %s118, %s119
      %p130 = scmp.eq.s32.totalorder %s26, 0
      %p131 = por %p129, %p130
      %p132 = scmp.ne.s32.totalorder %s118, %s119
      %p133 = scmp.eq.s32.totalorder %s27, 3
      %p134 = por %p132, %p133
      %p136 = scmp.ne.s32.totalorder %s119, %s135
      %p137 = scmp.eq.s32.totalorder %s27, 0
      %p138 = por %p136, %p137
      %s139 = ssub.s32 %s28, %s40
      %p140 = scmp.eq.s32.totalorder %s139, 0
      %s142 = sadd.s32 %s141, 1
      %s143 = scalar_select %p140, %s141, %s142
      %p146 = pneg %p140
      %p147 = scmp.eq.s32.totalorder %s21, 3
      %p148 = por %p146, %p147
      %p149 = scmp.ne.s32.totalorder %s141, %s144
      %p150 = scmp.eq.s32.totalorder %s21, 0
      %p151 = por %p149, %p150
      %p152 = scmp.ne.s32.totalorder %s141, %s144
      %p153 = scmp.eq.s32.totalorder %s26, 3
      %p154 = por %p152, %p153
      %p155 = scmp.ne.s32.totalorder %s144, %s145
      %p156 = scmp.eq.s32.totalorder %s26, 0
      %p157 = por %p155, %p156
      %p158 = scmp.ne.s32.totalorder %s144, %s145
      %p159 = scmp.eq.s32.totalorder %s27, 3
      %p160 = por %p158, %p159
      %p162 = scmp.ne.s32.totalorder %s145, %s161
      %p163 = scmp.eq.s32.totalorder %s27, 0
      %p164 = por %p162, %p163
      %p165 = scmp.le.s32.totalorder 1, %s21
      %p166 = scmp.lt.s32.totalorder %s21, 5
      %p167 = pnand %p165, %p166
      %p168 = pneg %p167
      // Predicated region
      $region9: #{tpu_custom_call.1} parent=5 // pred_check
        _
      $region10: #{tpu_custom_call.1} parent=5 // pred_check_branch
        %170 = sbr.rel (%p167) target = $region12
      $region11: #{tpu_custom_call.1} parent=5 // pred_region
        %s171 = ssub.s32 %s21, 1
        // Predicated region
        $region13: #{tpu_custom_call.1} parent=11 // pred_check
          %p172 = pneg %p82
        $region14: #{tpu_custom_call.1} parent=11 // pred_check_branch
          %174 = sbr.rel (%p172) target = $region16
        $region15: #{tpu_custom_call.1} parent=11 // pred_region
          %s176 = ssub.s32 512, 512
          %177 = vsyncadd [#allocation8], %s176
          %s178 = sshll.u32 [#allocation7], 4
          %s179 = int_to_ptr.vmem [resolvable:$true] %s178
          %184 = dma.hbm_to_vmem [thread:$0]  %s1, 512, %s179, [#allocation8], 256, 256, 16
        $region16: #{tpu_custom_call.1} parent=11 // pred_fallthru
          _
        // Predicated region
        $region17: #{tpu_custom_call.1} parent=11 // pred_check
          %p185 = pneg %p103
        $region18: #{tpu_custom_call.1} parent=11 // pred_check_branch
          %187 = sbr.rel (%p185) target = $region20
        $region19: #{tpu_custom_call.1} parent=11 // pred_region
          %s189 = ssub.s32 2048, 2048
          %190 = vsyncadd [#allocation8], %s189
          %s191 = sshll.u32 [#allocation9], 4
          %s192 = int_to_ptr.vmem [resolvable:$true] %s191
          %197 = dma.hbm_to_vmem [thread:$0]  %s2, 2048, %s192, [#allocation8], 128, 128, 8
        $region20: #{tpu_custom_call.1} parent=11 // pred_fallthru
          _
      $region12: #{tpu_custom_call.1} parent=5 // pred_fallthru
        _
      %p198 = scmp.lt.s32.totalorder %s21, 4
      // Predicated region
      $region21: #{tpu_custom_call.1} parent=5 // pred_check
        %p199 = pneg %p198
      $region22: #{tpu_custom_call.1} parent=5 // pred_check_branch
        %201 = sbr.rel (%p199) target = $region24
      $region23: #{tpu_custom_call.1} parent=5 // pred_region
        // Predicated region
        $region25: #{tpu_custom_call.1} parent=23 // pred_check
          %p202 = pneg %p55
        $region26: #{tpu_custom_call.1} parent=23 // pred_check_branch
          %204 = sbr.rel (%p202) target = $region28
        $region27: #{tpu_custom_call.1} parent=23 // pred_region
          %s205 = sand.u32 %s45, 1
          %s206 = scalar_lea.sflag [#allocation5], %s205
          %s207 = sand.u32 %s45, 1
          %s208 = smul.addr %s207, 8
          %s209 = scalar_lea.vmem [#allocation4], %s208
          %s211 = ssub.s32 128, 128
          %212 = vsyncadd %s206, %s211
          %s213 = smul.addr %s28, 2
          %s214 = sadd.s32 %s29, %s213
          %s215 = smul.addr %s214, 128
          %s216 = scalar_lea.hbm %s0, %s215
          %s218 = sshll.u32 %s209, 4
          %s219 = int_to_ptr.vmem [resolvable:$true] %s218
          %221 = dma.hbm_to_vmem [thread:$0]  %s216, 128, %s219, %s206
        $region28: #{tpu_custom_call.1} parent=23 // pred_fallthru
          _
      $region24: #{tpu_custom_call.1} parent=5 // pred_fallthru
        _
      %p222 = scmp.le.s32.totalorder 1, %s21
      %p223 = scmp.lt.s32.totalorder %s21, 5
      %p224 = pnand %p222, %p223
      %p225 = pneg %p224
      // Predicated region
      $region29: #{tpu_custom_call.1} parent=5 // pred_check
        _
      $region30: #{tpu_custom_call.1} parent=5 // pred_check_branch
        %227 = sbr.rel (%p224) target = $region32
      $region31: #{tpu_custom_call.1} parent=5 // pred_region
        %s228 = ssub.s32 %s21, 1
        %s229 = sand.u32 %s48, 1
        %s230 = scalar_lea.sflag [#allocation5], %s229
        %s231 = sand.u32 %s48, 1
        %s232 = smul.addr %s231, 8
        %s233 = scalar_lea.vmem [#allocation4], %s232
        // Predicated region
        $region33: #{tpu_custom_call.1} parent=31 // pred_check
          %p234 = pneg %p61
        $region34: #{tpu_custom_call.1} parent=31 // pred_check_branch
          %236 = sbr.rel (%p234) target = $region36
        $region35: #{tpu_custom_call.1} parent=31 // pred_region
          %237 = dma.done %s230, 128
        $region36: #{tpu_custom_call.1} parent=31 // pred_fallthru
          _
        // Predicated region
        $region37: #{tpu_custom_call.1} parent=31 // pred_check
          %p238 = pneg %p82
        $region38: #{tpu_custom_call.1} parent=31 // pred_check_branch
          %240 = sbr.rel (%p238) target = $region40
        $region39: #{tpu_custom_call.1} parent=31 // pred_region
          %241 = dma.done [#allocation8], 512
        $region40: #{tpu_custom_call.1} parent=31 // pred_fallthru
          _
        // Predicated region
        $region41: #{tpu_custom_call.1} parent=31 // pred_check
          %p242 = pneg %p103
        $region42: #{tpu_custom_call.1} parent=31 // pred_check_branch
          %244 = sbr.rel (%p242) target = $region44
        $region43: #{tpu_custom_call.1} parent=31 // pred_region
          %245 = dma.done [#allocation8], 2048
        $region44: #{tpu_custom_call.1} parent=31 // pred_fallthru
          _
        %s246 = sand.u32 %s48, 1
        %s247 = scalar_lea.sflag [#allocation5], %s246
        %s248 = sand.u32 %s48, 1
        %s249 = smul.addr %s248, 8
        %s250 = scalar_lea.vmem [#allocation4], %s249
        %p251 = pneg %p61
        %p252 = pneg %p58
        %p253 = pneg %p82
        %p254 = pneg %p79
        %p255 = pneg %p103
        %p256 = pneg %p100
        %p257 = pneg %p131
        %p258 = pneg %p128
        %s259 = sand.u32 %s118, 1
        %s260 = scalar_lea.sflag [#allocation6], %s259
        %s261 = sand.u32 %s118, 1
        %s262 = smul.addr %s261, 8
        %s263 = scalar_lea.vmem [#allocation10], %s262
        %p264 = pneg %p157
        %p265 = pneg %p154
        %s266 = sand.u32 %s144, 1
        %s267 = scalar_lea.sflag [#allocation12], %s266
        %s268 = sand.u32 %s144, 1
        %s269 = scalar_lea.vmem [#allocation11], %s268
        %p270 = scmp.eq.s32.totalorder %s31, 0
        // Predicated region
        $region45: #{tpu_custom_call.1} parent=31 // pred_check
          %p271 = pneg %p270
        $region46: #{tpu_custom_call.1} parent=31 // pred_check_branch
          %273 = sbr.rel (%p271) target = $region48
        $region47: #{tpu_custom_call.1} parent=31 // pred_region
          %274 = vst [vmem:[#allocation2] sm:$0x1] 0.0
          %275 = vst [vmem:[#allocation3] sm:$0x1] -inf
        $region48: #{tpu_custom_call.1} parent=31 // pred_fallthru
          _
        %v276 = vld [vmem:[%s233] sm:$0xff]
        %v277 = vld [vmem:[#allocation7] sm:$0xff]
        %v278 = vld [vmem:[#allocation7 + $0x8] sm:$0xff]
        %v279 = vld [vmem:[#allocation7 + $0x10] sm:$0xff]
        %v280 = vld [vmem:[#allocation7 + $0x18] sm:$0xff]
        %vm281 = vcmask 130048
        %v283 = vsel %vm281, %v276, 0
        %285 = vmatprep.subr.mxu0 %v278
        %286 = vmatpush1.msra.mxu0 %v277
        %287 = vmatprep.subr.mxu0 %v280
        %288 = vmatpush1.msra.mxu0 %v279
        %289 = vmatprep.subr.mxu0 0.0
        %290 = vmatpush1.msra.mxu0 0.0
        %291 = vmatprep.subr.mxu0 0.0
        %292 = vmatpush1.msra.mxu0 0.0
        %293 = vmatprep.subr.mxu0 0.0
        %294 = vmatpush1.msra.mxu0 0.0
        %295 = vmatprep.subr.mxu0 0.0
        %296 = vmatpush1.msra.mxu0 0.0
        %297 = vmatprep.subr.mxu0 0.0
        %298 = vmatpush1.msra.mxu0 0.0
        %299 = vmatprep.subr.mxu0 0.0
        %300 = vmatpush1.msra.mxu0 0.0
        %301 = vmatprep.subr.mxu0 0.0
        %302 = vmatpush1.msra.mxu0 0.0
        %303 = vmatprep.subr.mxu0 0.0
        %304 = vmatpush1.msra.mxu0 0.0
        %305 = vmatprep.subr.mxu0 0.0
        %306 = vmatpush1.msra.mxu0 0.0
        %307 = vmatprep.subr.mxu0 0.0
        %308 = vmatpush1.msra.mxu0 0.0
        %309 = vmatprep.subr.mxu0 0.0
        %310 = vmatpush1.msra.mxu0 0.0
        %311 = vmatprep.subr.mxu0 0.0
        %312 = vmatpush1.msra.mxu0 0.0
        %313 = vmatprep.subr.mxu0 0.0
        %314 = vmatpush1.msra.mxu0 0.0
        %315 = vmatprep.subr.mxu0 0.0
        %316 = vmatpush1.msra.mxu0 0.0
        %317 = vmatprep.subr.mxu0 0.0
        %318 = vmatpush1.msra.mxu0 0.0
        %319 = vmatprep.subr.mxu0 0.0
        %320 = vmatpush1.msra.mxu0 0.0
        %321 = vmatprep.subr.mxu0 0.0
        %322 = vmatpush1.msra.mxu0 0.0
        %323 = vmatprep.subr.mxu0 0.0
        %324 = vmatpush1.msra.mxu0 0.0
        %325 = vmatprep.subr.mxu0 0.0
        %326 = vmatpush1.msra.mxu0 0.0
        %327 = vmatprep.subr.mxu0 0.0
        %328 = vmatpush1.msra.mxu0 0.0
        %329 = vmatprep.subr.mxu0 0.0
        %330 = vmatpush1.msra.mxu0 0.0
        %331 = vmatprep.subr.mxu0 0.0
        %332 = vmatpush1.msra.mxu0 0.0
        %333 = vmatprep.subr.mxu0 0.0
        %334 = vmatpush1.msra.mxu0 0.0
        %335 = vmatprep.subr.mxu0 0.0
        %336 = vmatpush1.msra.mxu0 0.0
        %337 = vmatprep.subr.mxu0 0.0
        %338 = vmatpush1.msra.mxu0 0.0
        %339 = vmatprep.subr.mxu0 0.0
        %340 = vmatpush1.msra.mxu0 0.0
        %341 = vmatprep.subr.mxu0 0.0
        %342 = vmatpush1.msra.mxu0 0.0
        %343 = vmatprep.subr.mxu0 0.0
        %344 = vmatpush1.msra.mxu0 0.0
        %345 = vmatprep.subr.mxu0 0.0
        %346 = vmatpush1.msra.mxu0 0.0
        %347 = vmatprep.subr.mxu0 0.0
        %348 = vmatpush1.msra.mxu0 0.0
        %349 = vmatprep.mubr.f32.mxu0 0.0
        %350 = vmatmul.mubr.f32.gmra.mrb[0].mxu0 %v283
        %v351 = vpop.f32.mrb[0].mxu0
        %v352 = vadd.f32 0.0, %v351
        %v353 = vpop.f32.mrb[0].mxu0
        %v354 = vadd.f32 0.0, %v353
        %355 = vdwg.mxu0
        %v356 = vmax.f32 %v354, 0.0
        %v357 = vand.u32 2147483647, %v354
        %v358 = vsub.f32 0.0, %v357
        %v359 = vmul.f32 %v358, 1.442695
        %v360 = vpow.pop %v359
        %v361 = vadd.f32 %v360, 1.0
        %v362 = vlog2.pop %v361
        %v363 = vmul.f32 %v362, 0.6931472
        %v364 = vmul.f32 -0.5, %v360
        %v365 = vadd.f32 %v364, 1.0
        %v366 = vmul.f32 %v365, %v360
        %v367 = vand.u32 2147483647, %v360
        %vm368 = vcmp.lt.f32.partialorder %v367, 0.0004427343
        %v369 = vsel %vm368, %v366, %v363
        %v370 = vadd.f32 %v356, %v369
        %v371 = vsub.f32 0.0, %v370
        %v372 = vadd.f32 %v354, %v371
        %vm373 = vcmp.ge.f32.partialorder %v352, 0.0
        %v374 = vadd.f32 %v352, 0.5
        %v375 = vxor.u32 %v352, 2147483648
        %v376 = vmul.f32 %v375, 1.442695
        %v377 = vpow.pop %v376
        %v378 = vadd.f32 %v377, 1.0
        %v379 = vrcp.pop %v378
        %v380 = vmul.f32 1.0, %v379
        %v381 = vsel %vm373, %v374, %v380
        %v382 = vlog2.pop %v381
        %v383 = vmul.f32 %v382, 0.6931472
        %v384 = vadd.f32 %v372, %v383
        %v385 = vlaneseq
        %v386 = vshrl.u32 %v385, 7
        %v387 = vld [vmem:[#allocation2] sm:$0x1]
        %v388 = vld [vmem:[#allocation3] sm:$0x1]
        %vm389 = vcmp.ge.s32.totalorder %v386, 1
        %v390 = vrot.slane %v371, 7
        %v391 = vsel %vm389, %v390, 0.0
        %v392 = vadd.f32 %v371, %v391
        %vm393 = vcmp.ge.s32.totalorder %v386, 2
        %v394 = vrot.slane %v392, 6
        %v395 = vsel %vm393, %v394, 0.0
        %v396 = vadd.f32 %v392, %v395
        %vm397 = vcmp.ge.s32.totalorder %v386, 4
        %v398 = vrot.slane %v396, 4
        %v399 = vsel %vm397, %v398, 0.0
        %v400 = vadd.f32 %v396, %v399
        %v402 = vlaneseq
        %v403 = vshrl.u32 %v402, 7
        %v404 = vsub.s32 0, %v403
        %v405 = vrot.slane %v387, %v404
        %v407 = vadd.f32 %v405, %v400
        %v408 = vsub.f32 %v384, %v407
        %v409 = vrot.slane %v408, 4
        %v410 = vmax.f32 %v408, %v409
        %v411 = vrot.slane %v410, 2
        %v412 = vmax.f32 %v410, %v411
        %v413 = vrot.slane %v412, 1
        %v414 = vmax.f32 %v412, %v413
        %v415 = vmax.f32 %v388, %v414
        %v417 = vlaneseq
        %v418 = vshrl.u32 %v417, 7
        %v419 = vsub.s32 0, %v418
        %v420 = vrot.slane %v415, %v419
        %v422 = vsub.f32 %v408, %v420
        %v423 = vmul.f32 %v422, 1.442695
        %v424 = vpow.pop %v423
        %v425 = vsub.f32 %v388, %v415
        %v426 = vmul.f32 %v425, 1.442695
        %v427 = vpow.pop %v426
        %v428 = vrot.slane %v424, 7
        %v429 = vsel %vm389, %v428, 0.0
        %v430 = vadd.f32 %v424, %v429
        %v431 = vrot.slane %v430, 6
        %v432 = vsel %vm393, %v431, 0.0
        %v433 = vadd.f32 %v430, %v432
        %v434 = vrot.slane %v433, 4
        %v435 = vsel %vm397, %v434, 0.0
        %v436 = vadd.f32 %v433, %v435
        %v438 = vlaneseq
        %v439 = vshrl.u32 %v438, 7
        %v440 = vsub.s32 0, %v439
        %v441 = vrot.slane %v427, %v440
        %v443 = vadd.f32 %v436, %v441
        %v444 = vadd.f32 %v407, %v420
        %v445 = vmul.f32 %v444, 1.442695
        %v446 = vpow.pop %v445
        %v447 = vmul.f32 %v446, %v443
        %448 = vst [vmem:[#allocation2 - $0x7] sm:$0x80] %v407
        %v449 = vlog2.pop %v443
        %v450 = vmul.f32 %v449, 0.6931472
        %v452 = vcombine.high %v450, %v450
        %v454 = vunpack.c.l.s4 1966171168
        %v455 = vunpack.c.0.s8 %v454
        %v456 = vlaneseq
        %v457 = vshrl.u32 %v456, 7
        %v458 = vsub.s32 %v455, %v457
        %v459 = vrot.slane %v452, %v458
        %v460 = vcombine.high %v459, %v459
        %v462 = vunpack.c.l.s4 1966171168
        %v463 = vunpack.c.0.s8 %v462
        %v464 = vlaneseq
        %v465 = vshrl.u32 %v464, 7
        %v466 = vsub.s32 %v463, %v465
        %v467 = vrot.slane %v460, %v466
        %v468 = vcombine.high %v467, %v467
        %v470 = vadd.f32 %v415, %v468
        %471 = vst [vmem:[#allocation3] sm:$0x1] %v470
        %p472 = scmp.eq.s32.totalorder %s31, 1
        // Predicated region
        $region49: #{tpu_custom_call.1} parent=31 // pred_check
          %p473 = pneg %p472
        $region50: #{tpu_custom_call.1} parent=31 // pred_check_branch
          %475 = sbr.rel (%p473) target = $region52
        $region51: #{tpu_custom_call.1} parent=31 // pred_region
          %476 = vst [vmem:[%s269 - $0x7] sm:$0x80] %v447
        $region52: #{tpu_custom_call.1} parent=31 // pred_fallthru
          _
        %v477 = vld [vmem:[#allocation9] sm:$0xff]
        %v478 = vld [vmem:[#allocation9 + $0x8] sm:$0xff]
        %v479 = vld [vmem:[#allocation9 + $0x10] sm:$0xff]
        %v480 = vld [vmem:[#allocation9 + $0x18] sm:$0xff]
        %v481 = vld [vmem:[#allocation9 + $0x20] sm:$0xff]
        %v482 = vld [vmem:[#allocation9 + $0x28] sm:$0xff]
        %v483 = vld [vmem:[#allocation9 + $0x30] sm:$0xff]
        %v484 = vld [vmem:[#allocation9 + $0x38] sm:$0xff]
        %v485 = vld [vmem:[#allocation9 + $0x40] sm:$0xff]
        %v486 = vld [vmem:[#allocation9 + $0x48] sm:$0xff]
        %v487 = vld [vmem:[#allocation9 + $0x50] sm:$0xff]
        %v488 = vld [vmem:[#allocation9 + $0x58] sm:$0xff]
        %v489 = vld [vmem:[#allocation9 + $0x60] sm:$0xff]
        %v490 = vld [vmem:[#allocation9 + $0x68] sm:$0xff]
        %v491 = vld [vmem:[#allocation9 + $0x70] sm:$0xff]
        %v492 = vld [vmem:[#allocation9 + $0x78] sm:$0xff]
        %493 = vmatprep.subr.mxu0 0.0
        %494 = vmatpush1.msra.mxu0 %v477
        %495 = vmatprep.subr.mxu0 0.0
        %496 = vmatpush1.msra.mxu0 %v478
        %497 = vmatprep.subr.mxu0 0.0
        %498 = vmatpush1.msra.mxu0 %v479
        %499 = vmatprep.subr.mxu0 0.0
        %500 = vmatpush1.msra.mxu0 %v480
        %501 = vmatprep.subr.mxu0 0.0
        %502 = vmatpush1.msra.mxu0 %v481
        %503 = vmatprep.subr.mxu0 0.0
        %504 = vmatpush1.msra.mxu0 %v482
        %505 = vmatprep.subr.mxu0 0.0
        %506 = vmatpush1.msra.mxu0 %v483
        %507 = vmatprep.subr.mxu0 0.0
        %508 = vmatpush1.msra.mxu0 %v484
        %509 = vmatprep.subr.mxu0 0.0
        %510 = vmatpush1.msra.mxu0 %v485
        %511 = vmatprep.subr.mxu0 0.0
        %512 = vmatpush1.msra.mxu0 %v486
        %513 = vmatprep.subr.mxu0 0.0
        %514 = vmatpush1.msra.mxu0 %v487
        %515 = vmatprep.subr.mxu0 0.0
        %516 = vmatpush1.msra.mxu0 %v488
        %517 = vmatprep.subr.mxu0 0.0
        %518 = vmatpush1.msra.mxu0 %v489
        %519 = vmatprep.subr.mxu0 0.0
        %520 = vmatpush1.msra.mxu0 %v490
        %521 = vmatprep.subr.mxu0 0.0
        %522 = vmatpush1.msra.mxu0 %v491
        %523 = vmatprep.subr.mxu0 0.0
        %524 = vmatpush1.msra.mxu0 %v492
        %525 = vmatprep.subr.mxu0 0.0
        %526 = vmatpush1.msra.mxu0 0.0
        %527 = vmatprep.subr.mxu0 0.0
        %528 = vmatpush1.msra.mxu0 0.0
        %529 = vmatprep.subr.mxu0 0.0
        %530 = vmatpush1.msra.mxu0 0.0
        %531 = vmatprep.subr.mxu0 0.0
        %532 = vmatpush1.msra.mxu0 0.0
        %533 = vmatprep.subr.mxu0 0.0
        %534 = vmatpush1.msra.mxu0 0.0
        %535 = vmatprep.subr.mxu0 0.0
        %536 = vmatpush1.msra.mxu0 0.0
        %537 = vmatprep.subr.mxu0 0.0
        %538 = vmatpush1.msra.mxu0 0.0
        %539 = vmatprep.subr.mxu0 0.0
        %540 = vmatpush1.msra.mxu0 0.0
        %541 = vmatprep.subr.mxu0 0.0
        %542 = vmatpush1.msra.mxu0 0.0
        %543 = vmatprep.subr.mxu0 0.0
        %544 = vmatpush1.msra.mxu0 0.0
        %545 = vmatprep.subr.mxu0 0.0
        %546 = vmatpush1.msra.mxu0 0.0
        %547 = vmatprep.subr.mxu0 0.0
        %548 = vmatpush1.msra.mxu0 0.0
        %549 = vmatprep.subr.mxu0 0.0
        %550 = vmatpush1.msra.mxu0 0.0
        %551 = vmatprep.subr.mxu0 0.0
        %552 = vmatpush1.msra.mxu0 0.0
        %553 = vmatprep.subr.mxu0 0.0
        %554 = vmatpush1.msra.mxu0 0.0
        %555 = vmatprep.subr.mxu0 0.0
        %556 = vmatpush1.msra.mxu0 0.0
        %557 = vmatprep.mubr.f32.mxu0 0.0
        %558 = vmatmul.mubr.f32.gmra.mrb[0].mxu0 %v447
        %v559 = vpop.f32.mrb[0].mxu0
        %v560 = vadd.f32 0.0, %v559
        %v561 = vpop.f32.mrb[0].mxu0
        %562 = vdwg.mxu0
        %563 = vst [vmem:[%s263] sm:$0xff] %v560
        %s564 = sand.u32 %s118, 1
        %s565 = scalar_lea.sflag [#allocation6], %s564
        %s566 = sand.u32 %s118, 1
        %s567 = smul.addr %s566, 8
        %s568 = scalar_lea.vmem [#allocation10], %s567
        %s569 = sand.u32 %s144, 1
        %s570 = scalar_lea.sflag [#allocation12], %s569
        %s571 = sand.u32 %s144, 1
        %s572 = scalar_lea.vmem [#allocation11], %s571
        // Predicated region
        $region53: #{tpu_custom_call.1} parent=31 // pred_check
          %p573 = pneg %p128
        $region54: #{tpu_custom_call.1} parent=31 // pred_check_branch
          %575 = sbr.rel (%p573) target = $region56
        $region55: #{tpu_custom_call.1} parent=31 // pred_region
          %s577 = ssub.s32 128, 128
          %578 = vsyncadd %s565, %s577
          %s579 = smul.addr %s30, 2
          %s580 = sadd.s32 %s31, %s579
          %s581 = smul.addr %s580, 128
          %s582 = scalar_lea.hbm %s3, %s581
          %s584 = sshll.u32 %s568, 4
          %s585 = int_to_ptr.vmem [resolvable:$true] %s584
          %587 = dma.vmem_to_hbm [thread:$0]  %s585, 128, %s582, %s565
        $region56: #{tpu_custom_call.1} parent=31 // pred_fallthru
          _
        // Predicated region
        $region57: #{tpu_custom_call.1} parent=31 // pred_check
          %p588 = pneg %p154
        $region58: #{tpu_custom_call.1} parent=31 // pred_check_branch
          %590 = sbr.rel (%p588) target = $region60
        $region59: #{tpu_custom_call.1} parent=31 // pred_region
          %s592 = ssub.s32 16, 16
          %593 = vsyncadd %s570, %s592
          %s594 = smul.addr %s30, 16
          %s595 = scalar_lea.hbm %s4, %s594
          %s597 = sshll.u32 %s572, 4
          %s598 = int_to_ptr.vmem [resolvable:$true] %s597
          %600 = dma.vmem_to_hbm [thread:$0]  %s598, 16, %s595, %s570
        $region60: #{tpu_custom_call.1} parent=31 // pred_fallthru
          _
      $region32: #{tpu_custom_call.1} parent=5 // pred_fallthru
        _
      %p601 = scmp.le.s32.totalorder 2, %s21
      // Predicated region
      $region61: #{tpu_custom_call.1} parent=5 // pred_check
        %p602 = pneg %p601
      $region62: #{tpu_custom_call.1} parent=5 // pred_check_branch
        %604 = sbr.rel (%p602) target = $region64
      $region63: #{tpu_custom_call.1} parent=5 // pred_region
        %s605 = ssub.s32 %s21, 2
        // Predicated region
        $region65: #{tpu_custom_call.1} parent=63 // pred_check
          %p606 = pneg %p134
        $region66: #{tpu_custom_call.1} parent=63 // pred_check_branch
          %608 = sbr.rel (%p606) target = $region68
        $region67: #{tpu_custom_call.1} parent=63 // pred_region
          %s609 = sand.u32 %s119, 1
          %s610 = scalar_lea.sflag [#allocation6], %s609
          %s611 = sand.u32 %s119, 1
          %s612 = smul.addr %s611, 8
          %s613 = scalar_lea.vmem [#allocation10], %s612
          %614 = dma.done %s610, 128
        $region68: #{tpu_custom_call.1} parent=63 // pred_fallthru
          _
        // Predicated region
        $region69: #{tpu_custom_call.1} parent=63 // pred_check
          %p615 = pneg %p160
        $region70: #{tpu_custom_call.1} parent=63 // pred_check_branch
          %617 = sbr.rel (%p615) target = $region72
        $region71: #{tpu_custom_call.1} parent=63 // pred_region
          %s618 = sand.u32 %s145, 1
          %s619 = scalar_lea.sflag [#allocation12], %s618
          %s620 = sand.u32 %s145, 1
          %s621 = scalar_lea.vmem [#allocation11], %s620
          %622 = dma.done %s619, 16
        $region72: #{tpu_custom_call.1} parent=63 // pred_fallthru
          _
      $region64: #{tpu_custom_call.1} parent=5 // pred_fallthru
        _
    $region6: #{tpu_custom_call.1} parent=1 // loop_footer
      %s25 = sadd.s32 1, %s21
    $region7: #{tpu_custom_call.1} parent=1 // loop_footer_branch
      %20 = sbr.rel target = $region3
    $region8: #{tpu_custom_call.1} parent=1 // loop_exit
      _
    %623 = vsyncpa [#allocation5], 1
    %s624 = scalar_lea.sflag [#allocation5], 1
    %625 = vsyncpa %s624, 1
    %626 = vsyncpa [#allocation8], 1
    %627 = vsyncpa [#allocation6], 1
    %s628 = scalar_lea.sflag [#allocation6], 1
    %629 = vsyncpa %s628, 1
    %630 = vsyncpa [#allocation12], 1
    %s631 = scalar_lea.sflag [#allocation12], 1
    %632 = vsyncpa %s631, 1

</llo_original>
